<compile_context>
chip_gen: v7x
topology: tpu7x:2x2x1
jax: 0.10.0
libtpu: 0.0.40
codegen_flags: <defaults>
</compile_context>

<pallas_src>
import functools

import jax
import jax.numpy as jnp
import numpy as np
from jax.experimental import pallas as pl
from jax.experimental.pallas import tpu as pltpu

BN_EPS = 1e-5
SLICE0 = 30  # per-chunk BN batch along the probe dim (matches the torch code)


def _round_up(x, m):
    return (x + m - 1) // m * m


def _classifier_kernel(probe_ref, gallery_ref, probe2_ref, gallery2_ref,
                       gamma_ref, beta_ref, wt_ref, b_ref, out_ref,
                       *, n_probe, chunk_p, n_gallery):
    cp, g_pad, f = probe2_ref.shape
    rows = cp * g_pad

    # diff = (probe - gallery) * (probe2 - gallery2); broadcast done in-kernel.
    # Padded rows/cols give exactly 0 because probe2/gallery2 are zero padded.
    d1 = probe_ref[...] - gallery_ref[...]            # (cp,1,f) - (1,g_pad,f)
    d2 = probe2_ref[...] - gallery2_ref[...]          # (cp,g_pad,f)
    diff = (d1 * d2).reshape(rows, f)                 # layout-trivial: g_pad % 8 == 0

    # Real (unpadded) row count of this chunk's BN batch.
    i = pl.program_id(0)
    valid_p = jnp.minimum(chunk_p, n_probe - i * chunk_p)
    inv_n = 1.0 / (valid_p.astype(jnp.float32) * float(n_gallery))

    # BatchNorm1d (training mode): fused single-pass sum + sum-of-squares.
    s = jnp.sum(diff, axis=0, keepdims=True)
    ss = jnp.sum(diff * diff, axis=0, keepdims=True)
    mean = s * inv_n
    var = jnp.maximum(ss * inv_n - mean * mean, 0.0)          # biased variance
    y = (diff - mean) * jax.lax.rsqrt(var + BN_EPS) * gamma_ref[...] + beta_ref[...]

    # Linear: y @ W^T + b on the MXU (lane-dense, class dim padded to 128).
    out_ref[...] = (
        jnp.dot(y, wt_ref[...], preferred_element_type=jnp.float32) + b_ref[...]
    )


def _pad_to(x, shape):
    pads = [(0, t - s) for s, t in zip(x.shape, shape)]
    if any(hi for _, hi in pads):
        x = jnp.pad(x, pads)
    return x


def classifier_forward(probe, gallery2, probe2, gallery, params):
    """Mirrors Classifier.forward (including the slice0=30 chunking branch)."""
    gamma, beta, w, b = params
    n_probe, n_gallery, feat = gallery2.shape
    class_num = w.shape[0]

    # torch .expand() equivalents — kept un-materialized (broadcast in kernel).
    probe = jnp.broadcast_to(probe, (n_probe, 1, feat)).astype(jnp.float32)
    gallery = jnp.broadcast_to(gallery, (1, n_gallery, feat)).astype(jnp.float32)
    probe2 = probe2.astype(jnp.float32)
    gallery2 = gallery2.astype(jnp.float32)

    chunk_p = n_probe if n_probe < SLICE0 else SLICE0
    num_chunks = pl.cdiv(n_probe, chunk_p)
    p_pad = num_chunks * chunk_p
    g_pad = _round_up(n_gallery, 8)
    c_pad = _round_up(class_num, 128)

    probe_p = _pad_to(probe, (p_pad, 1, feat))
    gallery_p = _pad_to(gallery, (1, g_pad, feat))
    probe2_p = _pad_to(probe2, (p_pad, g_pad, feat))
    gallery2_p = _pad_to(gallery2, (p_pad, g_pad, feat))

    # Hoisted once per forward: transposed + lane-padded weight/bias, BN params.
    wt = _pad_to(w.T.astype(jnp.float32), (feat, c_pad))
    bias = _pad_to(b.reshape(1, class_num).astype(jnp.float32), (1, c_pad))
    gamma2 = gamma.reshape(1, feat).astype(jnp.float32)
    beta2 = beta.reshape(1, feat).astype(jnp.float32)

    # Explicit VMEM budget: double-buffered gridded tiles + resident params.
    fbytes = 4
    blk_in = (chunk_p * feat + g_pad * feat + 2 * chunk_p * g_pad * feat) * fbytes
    blk_out = chunk_p * g_pad * c_pad * fbytes
    resident = (2 * feat + feat * c_pad + c_pad) * fbytes
    vmem_limit = int(min(64 * 1024 * 1024,
                         max(16 * 1024 * 1024,
                             6 * (blk_in + blk_out) + 2 * resident)))

    kernel = functools.partial(
        _classifier_kernel,
        n_probe=n_probe, chunk_p=chunk_p, n_gallery=n_gallery)

    out = pl.pallas_call(
        kernel,
        out_shape=jax.ShapeDtypeStruct((p_pad * g_pad, c_pad), jnp.float32),
        grid=(num_chunks,),
        in_specs=[
            pl.BlockSpec((chunk_p, 1, feat), lambda i: (i, 0, 0)),      # probe
            pl.BlockSpec((1, g_pad, feat), lambda i: (0, 0, 0)),        # gallery (resident)
            pl.BlockSpec((chunk_p, g_pad, feat), lambda i: (i, 0, 0)),  # probe2
            pl.BlockSpec((chunk_p, g_pad, feat), lambda i: (i, 0, 0)),  # gallery2
            pl.BlockSpec((1, feat), lambda i: (0, 0)),                  # gamma (resident)
            pl.BlockSpec((1, feat), lambda i: (0, 0)),                  # beta (resident)
            pl.BlockSpec((feat, c_pad), lambda i: (0, 0)),              # W^T (resident)
            pl.BlockSpec((1, c_pad), lambda i: (0, 0)),                 # bias (resident)
        ],
        out_specs=pl.BlockSpec((chunk_p * g_pad, c_pad), lambda i: (i, 0)),
        compiler_params=pltpu.CompilerParams(
            dimension_semantics=("parallel",),
            vmem_limit_bytes=vmem_limit,
        ),
    )(probe_p, gallery_p, probe2_p, gallery2_p, gamma2, beta2, wt, bias)

    return out.reshape(p_pad, g_pad, c_pad)[:n_probe, :n_gallery, :class_num]


def init_params(key, feat_num, class_num):
    # init.constant_(BN.weight, 1); init.constant_(BN.bias, 0)
    gamma = jnp.ones((feat_num,), jnp.float32)
    beta = jnp.zeros((feat_num,), jnp.float32)
    # init.normal_(linear.weight, std=0.001); init.constant_(linear.bias, 0)
    w = 0.001 * jax.random.normal(key, (class_num, feat_num), jnp.float32)
    b = jnp.zeros((class_num,), jnp.float32)
    return gamma, beta, w, b


def _reference_forward(probe, gallery2, probe2, gallery, params):
    """Pure numpy (f64) replica of the torch forward, for correctness check."""
    gamma, beta, w, b = (np.asarray(p, np.float64) for p in params)
    p2 = np.asarray(probe2, np.float64)
    g2 = np.asarray(gallery2, np.float64)
    P, G, F = g2.shape
    pe = np.broadcast_to(np.asarray(probe, np.float64), (P, G, F))
    ge = np.broadcast_to(np.asarray(gallery, np.float64), (P, G, F))

    def chunk(s, e):
        d = ((pe[s:e] - ge[s:e]) * (p2[s:e] - g2[s:e])).reshape(-1, F)
        m = d.mean(0, keepdims=True)
        v = ((d - m) ** 2).mean(0, keepdims=True)
        y = (d - m) / np.sqrt(v + BN_EPS) * gamma + beta
        return (y @ w.T + b).reshape(e - s, G, -1)

    if P < SLICE0:
        return chunk(0, P)
    outs = []
    it = int(np.floor(P / SLICE0))
    for i in range(it):
        outs.append(chunk(i * SLICE0, (i + 1) * SLICE0))
    if P > it * SLICE0:
        outs.append(chunk(it * SLICE0, P))
    return np.concatenate(outs, 0)


if __name__ == "__main__":
    feat_num, class_num = 32, 16
    key = jax.random.PRNGKey(0)
    k_w, k_data = jax.random.split(key)
    params = init_params(k_w, feat_num, class_num)

    fwd = jax.jit(classifier_forward)

    # (4, 8): single-chunk branch; (64, 12): chunked branch with tail + padding.
    for n_probe, n_gallery in ((4, 8), (64, 12)):
        k_p, k_g, k_p2, k_g2, k_data = jax.random.split(k_data, 5)
        probe = jax.random.normal(k_p, (n_probe, 1, feat_num), jnp.float32)
        gallery = jax.random.normal(k_g, (1, n_gallery, feat_num), jnp.float32)
        probe2 = jax.random.normal(k_p2, (n_probe, n_gallery, feat_num), jnp.float32)
        gallery2 = jax.random.normal(k_g2, (n_probe, n_gallery, feat_num), jnp.float32)

        out = fwd(probe, gallery2, probe2, gallery, params)
        out = jax.block_until_ready(out)
        assert out.shape == (n_probe, n_gallery, class_num), out.shape
        assert bool(jnp.all(jnp.isfinite(out)))

        ref = _reference_forward(probe, gallery2, probe2, gallery, params)
        np.testing.assert_allclose(np.asarray(out), ref, rtol=1e-4, atol=1e-6)

    print("KERNEL_OK")
</pallas_src>

<mosaic_0001>
module attributes {stable_mosaic.version = 11 : i64} {
  func.func @_classifier_kernel(%arg0: i32, %arg1: memref<4x1x32xf32, #tpu.memory_space<vmem>>, %arg2: memref<1x8x32xf32, #tpu.memory_space<vmem>>, %arg3: memref<4x8x32xf32, #tpu.memory_space<vmem>>, %arg4: memref<4x8x32xf32, #tpu.memory_space<vmem>>, %arg5: memref<1x32xf32, #tpu.memory_space<vmem>>, %arg6: memref<1x32xf32, #tpu.memory_space<vmem>>, %arg7: memref<32x128xf32, #tpu.memory_space<vmem>>, %arg8: memref<1x128xf32, #tpu.memory_space<vmem>>, %arg9: memref<32x128xf32, #tpu.memory_space<vmem>>) attributes {dimension_semantics = [#tpu.dimension_semantics<parallel>], iteration_bounds = array<i64: 1>, scalar_prefetch = 0 : i64, scratch_operands = 0 : i64, tpu.core_type = #tpu.core_type<tc>, window_params = [{transform_indices = @transform_0, window_bounds = array<i64: 4, 1, 32>}, {pipeline_mode = #tpu.pipeline_mode<synchronous>, transform_indices = @transform_1, window_bounds = array<i64: 1, 8, 32>}, {transform_indices = @transform_2, window_bounds = array<i64: 4, 8, 32>}, {transform_indices = @transform_3, window_bounds = array<i64: 4, 8, 32>}, {pipeline_mode = #tpu.pipeline_mode<synchronous>, transform_indices = @transform_4, window_bounds = array<i64: 1, 32>}, {pipeline_mode = #tpu.pipeline_mode<synchronous>, transform_indices = @transform_5, window_bounds = array<i64: 1, 32>}, {pipeline_mode = #tpu.pipeline_mode<synchronous>, transform_indices = @transform_6, window_bounds = array<i64: 32, 128>}, {pipeline_mode = #tpu.pipeline_mode<synchronous>, transform_indices = @transform_7, window_bounds = array<i64: 1, 128>}, {transform_indices = @transform_8, window_bounds = array<i64: 32, 128>}]} {
    %c0 = arith.constant 0 : index
    %c0_0 = arith.constant 0 : index
    %c0_1 = arith.constant 0 : index
    %0 = vector.load %arg1[%c0, %c0_0, %c0_1] : memref<4x1x32xf32, #tpu.memory_space<vmem>>, vector<4x1x32xf32>
    %c0_2 = arith.constant 0 : index
    %c0_3 = arith.constant 0 : index
    %c0_4 = arith.constant 0 : index
    %1 = vector.load %arg2[%c0_2, %c0_3, %c0_4] : memref<1x8x32xf32, #tpu.memory_space<vmem>>, vector<1x8x32xf32>
    %2 = vector.broadcast %0 : vector<4x1x32xf32> to vector<4x8x32xf32>
    %3 = vector.broadcast %1 : vector<1x8x32xf32> to vector<4x8x32xf32>
    %4 = arith.subf %2, %3 : vector<4x8x32xf32>
    %c0_5 = arith.constant 0 : index
    %c0_6 = arith.constant 0 : index
    %c0_7 = arith.constant 0 : index
    %5 = vector.load %arg3[%c0_5, %c0_6, %c0_7] : memref<4x8x32xf32, #tpu.memory_space<vmem>>, vector<4x8x32xf32>
    %c0_8 = arith.constant 0 : index
    %c0_9 = arith.constant 0 : index
    %c0_10 = arith.constant 0 : index
    %6 = vector.load %arg4[%c0_8, %c0_9, %c0_10] : memref<4x8x32xf32, #tpu.memory_space<vmem>>, vector<4x8x32xf32>
    %7 = arith.subf %5, %6 : vector<4x8x32xf32>
    %8 = arith.mulf %4, %7 : vector<4x8x32xf32>
    %9 = vector.shape_cast %8 : vector<4x8x32xf32> to vector<32x32xf32>
    %c4_i32 = arith.constant 4 : i32
    %10 = arith.muli %arg0, %c4_i32 : i32
    %c4_i32_11 = arith.constant 4 : i32
    %11 = arith.subi %c4_i32_11, %10 : i32
    %c4_i32_12 = arith.constant 4 : i32
    %12 = arith.minsi %c4_i32_12, %11 : i32
    %13 = arith.sitofp %12 : i32 to f32
    %cst = arith.constant 8.000000e+00 : f32
    %14 = arith.mulf %13, %cst : f32
    %cst_13 = arith.constant 1.000000e+00 : f32
    %15 = arith.divf %cst_13, %14 : f32
    %cst_14 = arith.constant dense<0.000000e+00> : vector<32xf32>
    %16 = vector.multi_reduction <add>, %9, %cst_14 [0] : vector<32x32xf32> to vector<32xf32>
    %17 = vector.shape_cast %16 : vector<32xf32> to vector<1x32xf32>
    %18 = arith.mulf %9, %9 : vector<32x32xf32>
    %cst_15 = arith.constant dense<0.000000e+00> : vector<32xf32>
    %19 = vector.multi_reduction <add>, %18, %cst_15 [0] : vector<32x32xf32> to vector<32xf32>
    %20 = vector.shape_cast %19 : vector<32xf32> to vector<1x32xf32>
    %21 = vector.broadcast %15 : f32 to vector<1x32xf32>
    %22 = arith.mulf %17, %21 : vector<1x32xf32>
    %23 = vector.broadcast %15 : f32 to vector<1x32xf32>
    %24 = arith.mulf %20, %23 : vector<1x32xf32>
    %25 = arith.mulf %22, %22 : vector<1x32xf32>
    %26 = arith.subf %24, %25 : vector<1x32xf32>
    %cst_16 = arith.constant 0.000000e+00 : f32
    %27 = vector.broadcast %cst_16 : f32 to vector<1x32xf32>
    %28 = arith.maximumf %26, %27 : vector<1x32xf32>
    %29 = vector.broadcast %22 : vector<1x32xf32> to vector<32x32xf32>
    %30 = arith.subf %9, %29 : vector<32x32xf32>
    %cst_17 = arith.constant 9.99999974E-6 : f32
    %31 = vector.broadcast %cst_17 : f32 to vector<1x32xf32>
    %32 = arith.addf %28, %31 : vector<1x32xf32>
    %33 = math.rsqrt %32 : vector<1x32xf32>
    %34 = vector.broadcast %33 : vector<1x32xf32> to vector<32x32xf32>
    %35 = arith.mulf %30, %34 : vector<32x32xf32>
    %c0_18 = arith.constant 0 : index
    %c0_19 = arith.constant 0 : index
    %36 = vector.load %arg5[%c0_18, %c0_19] : memref<1x32xf32, #tpu.memory_space<vmem>>, vector<1x32xf32>
    %37 = vector.broadcast %36 : vector<1x32xf32> to vector<32x32xf32>
    %38 = arith.mulf %35, %37 : vector<32x32xf32>
    %c0_20 = arith.constant 0 : index
    %c0_21 = arith.constant 0 : index
    %39 = vector.load %arg6[%c0_20, %c0_21] : memref<1x32xf32, #tpu.memory_space<vmem>>, vector<1x32xf32>
    %40 = vector.broadcast %39 : vector<1x32xf32> to vector<32x32xf32>
    %41 = arith.addf %38, %40 : vector<32x32xf32>
    %c0_22 = arith.constant 0 : index
    %c0_23 = arith.constant 0 : index
    %42 = vector.load %arg7[%c0_22, %c0_23] : memref<32x128xf32, #tpu.memory_space<vmem>>, vector<32x128xf32>
    %cst_24 = arith.constant dense<0.000000e+00> : vector<32x128xf32>
    %43 = tpu.matmul %41, %42, %cst_24 {dimension_numbers = #tpu.dot_dimension_numbers<[1], [0], [0], [1], [0, 0, 1, 1], [], []>} : vector<32x32xf32>, vector<32x128xf32>, vector<32x128xf32> -> vector<32x128xf32>
    %c0_25 = arith.constant 0 : index
    %c0_26 = arith.constant 0 : index
    %44 = vector.load %arg8[%c0_25, %c0_26] : memref<1x128xf32, #tpu.memory_space<vmem>>, vector<1x128xf32>
    %45 = vector.broadcast %44 : vector<1x128xf32> to vector<32x128xf32>
    %46 = arith.addf %43, %45 : vector<32x128xf32>
    %c0_27 = arith.constant 0 : index
    %c0_28 = arith.constant 0 : index
    %47 = vector.load %arg9[%c0_27, %c0_28] : memref<32x128xf32, #tpu.memory_space<vmem>>, vector<32x128xf32>
    tpu.vector_store %arg9[%c0_27, %c0_28], %46 {strides = array<i32>} : memref<32x128xf32, #tpu.memory_space<vmem>>, vector<32x128xf32>,
    return
  }
  func.func @transform_0(%arg0: i32) -> (i32, i32, i32) {
    %c0_i32 = arith.constant 0 : i32
    %c0_i32_0 = arith.constant 0 : i32
    %c0_i32_1 = arith.constant 0 : i32
    return %arg0, %c0_i32, %c0_i32_0 : i32, i32, i32
  }
  func.func @transform_1(%arg0: i32) -> (i32, i32, i32) {
    %c0_i32 = arith.constant 0 : i32
    %c0_i32_0 = arith.constant 0 : i32
    %c0_i32_1 = arith.constant 0 : i32
    %c0_i32_2 = arith.constant 0 : i32
    return %c0_i32, %c0_i32_0, %c0_i32_1 : i32, i32, i32
  }
  func.func @transform_2(%arg0: i32) -> (i32, i32, i32) {
    %c0_i32 = arith.constant 0 : i32
    %c0_i32_0 = arith.constant 0 : i32
    %c0_i32_1 = arith.constant 0 : i32
    return %arg0, %c0_i32, %c0_i32_0 : i32, i32, i32
  }
  func.func @transform_3(%arg0: i32) -> (i32, i32, i32) {
    %c0_i32 = arith.constant 0 : i32
    %c0_i32_0 = arith.constant 0 : i32
    %c0_i32_1 = arith.constant 0 : i32
    return %arg0, %c0_i32, %c0_i32_0 : i32, i32, i32
  }
  func.func @transform_4(%arg0: i32) -> (i32, i32) {
    %c0_i32 = arith.constant 0 : i32
    %c0_i32_0 = arith.constant 0 : i32
    %c0_i32_1 = arith.constant 0 : i32
    return %c0_i32, %c0_i32_0 : i32, i32
  }
  func.func @transform_5(%arg0: i32) -> (i32, i32) {
    %c0_i32 = arith.constant 0 : i32
    %c0_i32_0 = arith.constant 0 : i32
    %c0_i32_1 = arith.constant 0 : i32
    return %c0_i32, %c0_i32_0 : i32, i32
  }
  func.func @transform_6(%arg0: i32) -> (i32, i32) {
    %c0_i32 = arith.constant 0 : i32
    %c0_i32_0 = arith.constant 0 : i32
    %c0_i32_1 = arith.constant 0 : i32
    return %c0_i32, %c0_i32_0 : i32, i32
  }
  func.func @transform_7(%arg0: i32) -> (i32, i32) {
    %c0_i32 = arith.constant 0 : i32
    %c0_i32_0 = arith.constant 0 : i32
    %c0_i32_1 = arith.constant 0 : i32
    return %c0_i32, %c0_i32_0 : i32, i32
  }
  func.func @transform_8(%arg0: i32) -> (i32, i32) {
    %c0_i32 = arith.constant 0 : i32
    %c0_i32_0 = arith.constant 0 : i32
    return %arg0, %c0_i32 : i32, i32
  }
}

</mosaic_0001>

<llo_original>
// kernel: classifier_forward.1
$region0: #{classifier_forward.1}
  #allocation0 [shape = 'u32[]', space=smem, size = 0x4, offset = 0x4, fixed_abs, tag = 'smem constant byte address 0x4 - core index']
  #allocation1 [shape = 'u32[144,128]{1,0:T(1,128)}', space=vmem, size = 0x12000, scoped, tag = 'internal scratch']
  %s0 = inlined_call_operand.vmem [shape: f32[4,1,32], index: 0, kind: input, shape index: {}]
  %s1 = inlined_call_operand.vmem [shape: f32[1,8,32], index: 1, kind: input, shape index: {}]
  %s2 = inlined_call_operand.vmem [shape: f32[4,8,32], index: 2, kind: input, shape index: {}]
  %s3 = inlined_call_operand.vmem [shape: f32[4,8,32], index: 3, kind: input, shape index: {}]
  %s4 = inlined_call_operand.vmem [shape: f32[1,32], index: 4, kind: input, shape index: {}]
  %s5 = inlined_call_operand.vmem [shape: f32[1,32], index: 5, kind: input, shape index: {}]
  %s6 = inlined_call_operand.vmem [shape: f32[32,128], index: 6, kind: input, shape index: {}]
  %s7 = inlined_call_operand.vmem [shape: f32[1,128], index: 7, kind: input, shape index: {}]
  %s8 = inlined_call_operand.hbm [shape: f32[32,128], index: 8, kind: output, shape index: {}]
  %s9 = sld [smem:[#allocation0]]
  $region42: #{classifier_forward.1} parent=0
    _
  %s11 = ssub.s32 1, %s9
  %s12 = scalar_select 0, %s11, %s9
  $region1: #{classifier_forward.1} parent=0
    #allocation2 [shape = 'u8[16384]{0}', space=vmem, size = 0x4000, scoped, tag = 'output window, operand 0, single buffered']
    #allocation3 [shape = 's32[1]{0}', space=sflag, size = 0x4, scoped, tag = 'scoped memory for classifier_forward.1']
    %13 = vsyncpa [#allocation3], 0
    // Predicated region
    $region2: #{classifier_forward.1} parent=1 // pred_check
      _
    $region3: #{classifier_forward.1} parent=1 // pred_check_branch
      %15 = sbr.rel (0) target = $region5
    $region4: #{classifier_forward.1} parent=1 // pred_region
      _
    $region5: #{classifier_forward.1} parent=1 // pred_fallthru
      _
    // Predicated region
    $region6: #{classifier_forward.1} parent=1 // pred_check
      _
    $region7: #{classifier_forward.1} parent=1 // pred_check_branch
      %17 = sbr.rel (0) target = $region9
    $region8: #{classifier_forward.1} parent=1 // pred_region
      _
    $region9: #{classifier_forward.1} parent=1 // pred_fallthru
      _
    // Predicated region
    $region10: #{classifier_forward.1} parent=1 // pred_check
      _
    $region11: #{classifier_forward.1} parent=1 // pred_check_branch
      %19 = sbr.rel (0) target = $region13
    $region12: #{classifier_forward.1} parent=1 // pred_region
      _
    $region13: #{classifier_forward.1} parent=1 // pred_fallthru
      _
    // Predicated region
    $region14: #{classifier_forward.1} parent=1 // pred_check
      _
    $region15: #{classifier_forward.1} parent=1 // pred_check_branch
      %21 = sbr.rel (0) target = $region17
    $region16: #{classifier_forward.1} parent=1 // pred_region
      _
    $region17: #{classifier_forward.1} parent=1 // pred_fallthru
      _
    // Predicated region
    $region18: #{classifier_forward.1} parent=1 // pred_check
      _
    $region19: #{classifier_forward.1} parent=1 // pred_check_branch
      %23 = sbr.rel (0) target = $region21
    $region20: #{classifier_forward.1} parent=1 // pred_region
      _
    $region21: #{classifier_forward.1} parent=1 // pred_fallthru
      _
    // Predicated region
    $region22: #{classifier_forward.1} parent=1 // pred_check
      _
    $region23: #{classifier_forward.1} parent=1 // pred_check_branch
      %25 = sbr.rel (0) target = $region25
    $region24: #{classifier_forward.1} parent=1 // pred_region
      _
    $region25: #{classifier_forward.1} parent=1 // pred_fallthru
      _
    // Predicated region
    $region26: #{classifier_forward.1} parent=1 // pred_check
      _
    $region27: #{classifier_forward.1} parent=1 // pred_check_branch
      %27 = sbr.rel (0) target = $region29
    $region28: #{classifier_forward.1} parent=1 // pred_region
      _
    $region29: #{classifier_forward.1} parent=1 // pred_fallthru
      _
    // Predicated region
    $region30: #{classifier_forward.1} parent=1 // pred_check
      _
    $region31: #{classifier_forward.1} parent=1 // pred_check_branch
      %29 = sbr.rel (0) target = $region33
    $region32: #{classifier_forward.1} parent=1 // pred_region
      _
    $region33: #{classifier_forward.1} parent=1 // pred_fallthru
      _
    %v30 = vld [vmem:[%s0] sm:$0x1]
    %v31 = vld [vmem:[%s0 + $0x1] sm:$0x1]
    %v32 = vld [vmem:[%s0 + $0x2] sm:$0x1]
    %v33 = vld [vmem:[%s0 + $0x3] sm:$0x1]
    %v34 = vld [vmem:[%s1] sm:$0xff]
    %v39 = vlaneseq
    %v40 = vshrl.u32 %v39, 7
    %v41 = vsub.s32 0, %v40
    %v42 = vrot.slane %v30, %v41
    %v43 = vlaneseq
    %v44 = vshrl.u32 %v43, 7
    %v45 = vsub.s32 0, %v44
    %v46 = vrot.slane %v31, %v45
    %v47 = vlaneseq
    %v48 = vshrl.u32 %v47, 7
    %v49 = vsub.s32 0, %v48
    %v50 = vrot.slane %v32, %v49
    %v51 = vlaneseq
    %v52 = vshrl.u32 %v51, 7
    %v53 = vsub.s32 0, %v52
    %v54 = vrot.slane %v33, %v53
    %v59 = vsub.f32 %v42, %v34
    %v60 = vsub.f32 %v46, %v34
    %v61 = vsub.f32 %v50, %v34
    %v62 = vsub.f32 %v54, %v34
    %v63 = vld [vmem:[%s2] sm:$0xff]
    %v64 = vld [vmem:[%s2 + $0x8] sm:$0xff]
    %v65 = vld [vmem:[%s2 + $0x10] sm:$0xff]
    %v66 = vld [vmem:[%s2 + $0x18] sm:$0xff]
    %v67 = vld [vmem:[%s3] sm:$0xff]
    %v68 = vld [vmem:[%s3 + $0x8] sm:$0xff]
    %v69 = vld [vmem:[%s3 + $0x10] sm:$0xff]
    %v70 = vld [vmem:[%s3 + $0x18] sm:$0xff]
    %v71 = vsub.f32 %v63, %v67
    %v72 = vsub.f32 %v64, %v68
    %v73 = vsub.f32 %v65, %v69
    %v74 = vsub.f32 %v66, %v70
    %v75 = vmul.f32 %v59, %v71
    %v76 = vmul.f32 %v60, %v72
    %v77 = vmul.f32 %v61, %v73
    %v78 = vmul.f32 %v62, %v74
    %s79 = smul.u32 0, 4
    %s80 = ssub.s32 4, %s79
    %p81 = scmp.lt.s32.totalorder %s80, 4
    %s82 = scalar_select %p81, %s80, 4
    %s83 = scvt.s32.f32 %s82
    %s84 = smul.f32 %s83, 8.0
    %v85 = vstv %s84
    %v86 = vrcp.pop %v85
    %s87 = vtos %v86
    %vm88 = vcmask 261120
    %v89 = vsel %vm88, %v75, 0.0
    %v90 = vsel %vm88, %v76, 0.0
    %v91 = vadd.f32 %v89, %v90
    %v92 = vsel %vm88, %v77, 0.0
    %v93 = vadd.f32 %v91, %v92
    %v94 = vsel %vm88, %v78, 0.0
    %v95 = vadd.f32 %v93, %v94
    %v96 = vrot.slane %v95, 4
    %v97 = vadd.f32 %v95, %v96
    %v98 = vrot.slane %v97, 2
    %v99 = vadd.f32 %v97, %v98
    %v100 = vrot.slane %v99, 1
    %v101 = vadd.f32 %v99, %v100
    %v102 = vmul.f32 %v75, %v75
    %v103 = vmul.f32 %v76, %v76
    %v104 = vmul.f32 %v77, %v77
    %v105 = vmul.f32 %v78, %v78
    %v106 = vsel %vm88, %v102, 0.0
    %v107 = vsel %vm88, %v103, 0.0
    %v108 = vadd.f32 %v106, %v107
    %v109 = vsel %vm88, %v104, 0.0
    %v110 = vadd.f32 %v108, %v109
    %v111 = vsel %vm88, %v105, 0.0
    %v112 = vadd.f32 %v110, %v111
    %v113 = vrot.slane %v112, 4
    %v114 = vadd.f32 %v112, %v113
    %v115 = vrot.slane %v114, 2
    %v116 = vadd.f32 %v114, %v115
    %v117 = vrot.slane %v116, 1
    %v118 = vadd.f32 %v116, %v117
    %v119 = vstv %s87
    %v120 = vmul.f32 %v101, %v119
    %v121 = vmul.f32 %v118, %v119
    %v122 = vmul.f32 %v120, %v120
    %v123 = vsub.f32 %v121, %v122
    %v124 = vmax.f32 %v123, 0.0
    %v125 = vsub.f32 %v75, %v120
    %v126 = vsub.f32 %v76, %v120
    %v127 = vsub.f32 %v77, %v120
    %v128 = vsub.f32 %v78, %v120
    %v129 = vadd.f32 %v124, 1e-05
    %v130 = vrsqrt.pop %v129
    %v131 = vmul.f32 %v125, %v130
    %v132 = vmul.f32 %v126, %v130
    %v133 = vmul.f32 %v127, %v130
    %v134 = vmul.f32 %v128, %v130
    %v135 = vld [vmem:[%s4] sm:$0x1]
    %v137 = vlaneseq
    %v138 = vshrl.u32 %v137, 7
    %v139 = vsub.s32 0, %v138
    %v140 = vrot.slane %v135, %v139
    %v142 = vmul.f32 %v131, %v140
    %v143 = vmul.f32 %v132, %v140
    %v144 = vmul.f32 %v133, %v140
    %v145 = vmul.f32 %v134, %v140
    %v146 = vld [vmem:[%s5] sm:$0x1]
    %v148 = vlaneseq
    %v149 = vshrl.u32 %v148, 7
    %v150 = vsub.s32 0, %v149
    %v151 = vrot.slane %v146, %v150
    %v153 = vadd.f32 %v142, %v151
    %v154 = vadd.f32 %v143, %v151
    %v155 = vadd.f32 %v144, %v151
    %v156 = vadd.f32 %v145, %v151
    %v157 = vld [vmem:[%s6] sm:$0xff]
    %v158 = vld [vmem:[%s6 + $0x8] sm:$0xff]
    %v159 = vld [vmem:[%s6 + $0x10] sm:$0xff]
    %v160 = vld [vmem:[%s6 + $0x18] sm:$0xff]
    %v161 = vld [vmem:[%s7] sm:$0x1]
    %v163 = vlaneseq
    %v164 = vshrl.u32 %v163, 7
    %v165 = vsub.s32 0, %v164
    %v166 = vrot.slane %v161, %v165
    %v169 = vsel %vm88, %v153, 0
    %v172 = vsel %vm88, %v154, 0
    %v175 = vsel %vm88, %v155, 0
    %v178 = vsel %vm88, %v156, 0
    %180 = vmatprep.subr.mxu0 0.0
    %181 = vmatpush1.msra.mxu0 %v157
    %182 = vmatprep.subr.mxu0 0.0
    %183 = vmatpush1.msra.mxu0 %v158
    %184 = vmatprep.subr.mxu0 0.0
    %185 = vmatpush1.msra.mxu0 %v159
    %186 = vmatprep.subr.mxu0 0.0
    %187 = vmatpush1.msra.mxu0 %v160
    %188 = vmatprep.subr.mxu0 0.0
    %189 = vmatpush1.msra.mxu0 0.0
    %190 = vmatprep.subr.mxu0 0.0
    %191 = vmatpush1.msra.mxu0 0.0
    %192 = vmatprep.subr.mxu0 0.0
    %193 = vmatpush1.msra.mxu0 0.0
    %194 = vmatprep.subr.mxu0 0.0
    %195 = vmatpush1.msra.mxu0 0.0
    %196 = vmatprep.subr.mxu0 0.0
    %197 = vmatpush1.msra.mxu0 0.0
    %198 = vmatprep.subr.mxu0 0.0
    %199 = vmatpush1.msra.mxu0 0.0
    %200 = vmatprep.subr.mxu0 0.0
    %201 = vmatpush1.msra.mxu0 0.0
    %202 = vmatprep.subr.mxu0 0.0
    %203 = vmatpush1.msra.mxu0 0.0
    %204 = vmatprep.subr.mxu0 0.0
    %205 = vmatpush1.msra.mxu0 0.0
    %206 = vmatprep.subr.mxu0 0.0
    %207 = vmatpush1.msra.mxu0 0.0
    %208 = vmatprep.subr.mxu0 0.0
    %209 = vmatpush1.msra.mxu0 0.0
    %210 = vmatprep.subr.mxu0 0.0
    %211 = vmatpush1.msra.mxu0 0.0
    %212 = vmatprep.subr.mxu0 0.0
    %213 = vmatpush1.msra.mxu0 0.0
    %214 = vmatprep.subr.mxu0 0.0
    %215 = vmatpush1.msra.mxu0 0.0
    %216 = vmatprep.subr.mxu0 0.0
    %217 = vmatpush1.msra.mxu0 0.0
    %218 = vmatprep.subr.mxu0 0.0
    %219 = vmatpush1.msra.mxu0 0.0
    %220 = vmatprep.subr.mxu0 0.0
    %221 = vmatpush1.msra.mxu0 0.0
    %222 = vmatprep.subr.mxu0 0.0
    %223 = vmatpush1.msra.mxu0 0.0
    %224 = vmatprep.subr.mxu0 0.0
    %225 = vmatpush1.msra.mxu0 0.0
    %226 = vmatprep.subr.mxu0 0.0
    %227 = vmatpush1.msra.mxu0 0.0
    %228 = vmatprep.subr.mxu0 0.0
    %229 = vmatpush1.msra.mxu0 0.0
    %230 = vmatprep.subr.mxu0 0.0
    %231 = vmatpush1.msra.mxu0 0.0
    %232 = vmatprep.subr.mxu0 0.0
    %233 = vmatpush1.msra.mxu0 0.0
    %234 = vmatprep.subr.mxu0 0.0
    %235 = vmatpush1.msra.mxu0 0.0
    %236 = vmatprep.subr.mxu0 0.0
    %237 = vmatpush1.msra.mxu0 0.0
    %238 = vmatprep.subr.mxu0 0.0
    %239 = vmatpush1.msra.mxu0 0.0
    %240 = vmatprep.subr.mxu0 0.0
    %241 = vmatpush1.msra.mxu0 0.0
    %242 = vmatprep.subr.mxu0 0.0
    %243 = vmatpush1.msra.mxu0 0.0
    %244 = vmatprep.mubr.f32.mxu0 0.0
    %245 = vmatmul.mubr.f32.gmra.mrb[0].mxu0 %v169
    %v246 = vpop.f32.mrb[0].mxu0
    %v247 = vadd.f32 %v166, %v246
    %v248 = vpop.f32.mrb[0].mxu0
    %249 = vmatprep.mubr.f32.mxu0 0.0
    %250 = vmatmul.mubr.f32.gmra.mrb[0].mxu0 %v172
    %v251 = vpop.f32.mrb[0].mxu0
    %v252 = vadd.f32 %v166, %v251
    %v253 = vpop.f32.mrb[0].mxu0
    %254 = vmatprep.mubr.f32.mxu0 0.0
    %255 = vmatmul.mubr.f32.gmra.mrb[0].mxu0 %v175
    %v256 = vpop.f32.mrb[0].mxu0
    %v257 = vadd.f32 %v166, %v256
    %v258 = vpop.f32.mrb[0].mxu0
    %259 = vmatprep.mubr.f32.mxu0 0.0
    %260 = vmatmul.mubr.f32.gmra.mrb[0].mxu0 %v178
    %v261 = vpop.f32.mrb[0].mxu0
    %v262 = vadd.f32 %v166, %v261
    %v263 = vpop.f32.mrb[0].mxu0
    %264 = vdwg.mxu0
    %265 = vst [vmem:[#allocation2] sm:$0xff] %v247
    %266 = vst [vmem:[#allocation2 + $0x8] sm:$0xff] %v252
    %267 = vst [vmem:[#allocation2 + $0x10] sm:$0xff] %v257
    %268 = vst [vmem:[#allocation2 + $0x18] sm:$0xff] %v262
    // Predicated region
    $region34: #{classifier_forward.1} parent=1 // pred_check
      _
    $region35: #{classifier_forward.1} parent=1 // pred_check_branch
      %270 = sbr.rel (0) target = $region37
    $region36: #{classifier_forward.1} parent=1 // pred_region
      %s272 = ssub.s32 512, 512
      %273 = vsyncadd [#allocation3], %s272
      %s274 = sshll.u32 [#allocation2], 4
      %s275 = int_to_ptr.vmem [resolvable:$true] %s274
      %280 = dma.vmem_to_hbm [thread:$0]  %s275, 512, %s8, [#allocation3], 128, 128, 8
    $region37: #{classifier_forward.1} parent=1 // pred_fallthru
      _
    // Predicated region
    $region38: #{classifier_forward.1} parent=1 // pred_check
      _
    $region39: #{classifier_forward.1} parent=1 // pred_check_branch
      %282 = sbr.rel (0) target = $region41
    $region40: #{classifier_forward.1} parent=1 // pred_region
      %283 = dma.done [#allocation3], 512
    $region41: #{classifier_forward.1} parent=1 // pred_fallthru
      _
    %284 = vsyncpa [#allocation3], 1

</llo_original>
